<compile_context>
chip_gen: v6e
topology: v6e:2x2x1
jax: 0.10.0
libtpu: 0.0.40
codegen_flags: <defaults>
</compile_context>

<pallas_src>
import functools

import numpy as np
import jax
import jax.numpy as jnp
from jax.experimental import pallas as pl
from jax.experimental.pallas import tpu as pltpu


def _round_up(x, m):
    return (x + m - 1) // m * m


def _pick_row_tile(H, Wp, max_pixels=8192):
    """Largest row-tile TH with TH | H, TH*Wp <= max_pixels, and a 128-lane
    aligned output block (TH*Wp % 128 == 0) -- or TH == H (full-dim block)."""
    divisors = [d for d in range(1, H + 1) if H % d == 0]
    legal = [d for d in divisors if d == H or (d * Wp) % 128 == 0]
    fitting = [d for d in legal if d * Wp <= max_pixels]
    if fitting:
        return max(fitting)
    # No 128-aligned divisor fits the budget; fall back to the smallest legal
    # tile (may exceed the budget for pathological W -- see TODOs above).
    return min(legal)


def cbr_kernel(x_ref, w_ref, mask_ref, o_ref, sum_ref, ssq_ref, *,
               wp, tile_h, eps, inv_hw):
    """One (image, sweep, row-tile) grid step.

    x_ref:    (Cinp, Lpad) f32   width-padded, channel-flat input rows for this
                                 tile (+1-row halo top/bottom), Lpad=(TH+2)*Wp+2
    w_ref:    (Cout, 9*Cinp) f32 folded conv weights, tap-major / channel-minor
    mask_ref: (1, M) f32         1.0 on real pixels, 0.0 on the 2 width-padding
                                 columns of each image row (M = TH*Wp)
    o_ref:    (Cout, M) f32      output tile: channels on sublanes, flat
                                 (width-padded) pixels on lanes
    sum_ref / ssq_ref: (Cout, 1) f32 streaming per-image sum / sum-of-squares
    """
    p = pl.program_id(1)   # 0: stats sweep, 1: normalize sweep
    t = pl.program_id(2)   # row tile
    m = tile_h * wp

    @pl.when(jnp.logical_and(p == 0, t == 0))
    def _init_stats():
        sum_ref[...] = jnp.zeros_like(sum_ref)
        ssq_ref[...] = jnp.zeros_like(ssq_ref)

    # In-kernel unfold: each 3x3 tap is a static lane-shifted slice of the flat
    # padded-width tile, so the whole conv is ONE MXU matmul (f32 accumulate).
    taps = [x_ref[:, kh * wp + kw: kh * wp + kw + m]
            for kh in range(3) for kw in range(3)]
    slab = jnp.concatenate(taps, axis=0)                     # (9*Cinp, M)
    acc = jnp.dot(w_ref[...], slab,
                  preferred_element_type=jnp.float32)        # (Cout, M)

    @pl.when(p == 0)
    def _accumulate_stats():
        am = acc * mask_ref[...]          # zero the width-padding columns
        sum_ref[...] += jnp.sum(am, axis=1, keepdims=True)
        ssq_ref[...] += jnp.sum(am * acc, axis=1, keepdims=True)

    @pl.when(p == 1)
    def _normalize_store():
        # InstanceNorm2d(affine=False): biased variance over the H*W real
        # pixels of this image; rsqrt goes to the EUP slot.
        mean = sum_ref[...] * inv_hw                          # (Cout, 1)
        var = jnp.maximum(ssq_ref[...] * inv_hw - mean * mean, 0.0)
        rstd = jax.lax.rsqrt(var + eps)
        o_ref[...] = jnp.maximum((acc - mean) * rstd, 0.0)


def cbr_forward(x_nchw, weight_oihw, bias=None, *, eps=1e-5):
    """one_conv forward: (N, Cin, H, W) f32 -> (N, Cout, H, W) f32.

    `bias` is accepted for API parity with nn.Conv2d but unused: a per-channel
    bias is exactly cancelled by InstanceNorm's mean subtraction.
    """
    del bias
    N, Cin, H, W = x_nchw.shape
    Cout = weight_oihw.shape[0]
    Wp = W + 2                       # padded width
    Cinp = _round_up(Cin, 8)         # sublane-aligned channel count (f32 tiles)
    K = 9 * Cinp

    TH = _pick_row_tile(H, Wp)       # image rows per tile
    nT = H // TH
    M = TH * Wp                      # flat (width-padded) pixels per tile
    Lp = (TH + 2) * Wp               # tile rows + halo, flattened per channel
    Lpad = Lp + 2                    # bottom-right tap of the last padding col

    # ---- glue (plain XLA): channel-flat, width-padded input row tiles -------
    x_pad = jnp.pad(x_nchw.astype(jnp.float32),
                    ((0, 0), (0, Cinp - Cin), (1, 1), (1, 1)))   # (N,Cinp,H+2,Wp)
    tiles = [x_pad[:, :, t * TH: t * TH + TH + 2, :].reshape(N, Cinp, Lp)
             for t in range(nT)]
    x_tiles = jnp.stack(tiles, axis=1)                           # (N,nT,Cinp,Lp)
    x_tiles = jnp.pad(x_tiles, ((0, 0), (0, 0), (0, 0), (0, Lpad - Lp)))

    # Folded weights: (Cout,Cin,3,3) -> (Cout,kh,kw,Cinp) -> (Cout, 9*Cinp),
    # matching the tap-major / channel-minor slab row order in the kernel.
    w = jnp.transpose(weight_oihw.astype(jnp.float32), (0, 2, 3, 1))
    w = jnp.pad(w, ((0, 0), (0, 0), (0, 0), (0, Cinp - Cin)))
    w_mat = w.reshape(Cout, K)

    # 0/1 mask over the flat padded-width pixel axis (1 = real pixel).
    mask = jnp.asarray((np.arange(M) % Wp < W).astype(np.float32).reshape(1, M))

    # VMEM budget for the chosen tile (double-buffered in/out + matmul temps),
    # with headroom; never below the 32 MiB default scoped limit.
    # TODO(synk): on v6e/v7x with Cout > 128 or 9*Cin > 128, round matmul tiles
    #             to 256 to fill the 2x256x256 MXUs.
    est = (2 * Cinp * Lpad * 4        # input tile, double buffered
           + 2 * Cout * M * 4         # output tile, double buffered
           + K * M * 4                # unfolded slab (value)
           + 4 * Cout * M * 4         # acc / epilogue temporaries
           + Cout * K * 4 + M * 4)    # resident weights + mask
    vmem_limit = int(min(max(2 * est, 32 * 1024 * 1024), 100 * 1024 * 1024))

    kernel = functools.partial(cbr_kernel, wp=Wp, tile_h=TH, eps=eps,
                               inv_hw=1.0 / float(H * W))

    out_flat = pl.pallas_call(
        kernel,
        out_shape=jax.ShapeDtypeStruct((N, Cout, H * Wp), jnp.float32),
        grid=(N, 2, nT),
        in_specs=[
            pl.BlockSpec((None, None, Cinp, Lpad), lambda n, p, t: (n, t, 0, 0)),
            pl.BlockSpec((Cout, K), lambda n, p, t: (0, 0)),
            pl.BlockSpec((1, M), lambda n, p, t: (0, 0)),
        ],
        # During the stats sweep (p == 0) every step maps to the image's first
        # block, which stays resident and is only written back after sweep 1
        # fills it -> each output block hits HBM exactly once.
        out_specs=pl.BlockSpec((None, Cout, M), lambda n, p, t: (n, 0, t * p)),
        scratch_shapes=[pltpu.VMEM((Cout, 1), jnp.float32),
                        pltpu.VMEM((Cout, 1), jnp.float32)],
        compiler_params=pltpu.CompilerParams(
            dimension_semantics=("parallel", "arbitrary", "arbitrary"),
            vmem_limit_bytes=vmem_limit,
        ),
    )(x_tiles, w_mat, mask)

    # Drop the 2 width-padding columns per row; (Cout, H, W) already matches
    # NCHW, so there is no transpose pass.
    return out_flat.reshape(N, Cout, H, Wp)[:, :, :, :W]


def cbr_reference(x_nchw, weight_oihw, bias, *, eps=1e-5):
    """Pure-JAX reference mirroring the PyTorch module (f32, HIGHEST prec)."""
    y = jax.lax.conv_general_dilated(
        x_nchw, weight_oihw, window_strides=(1, 1),
        padding=((1, 1), (1, 1)),
        dimension_numbers=("NCHW", "OIHW", "NCHW"),
        precision=jax.lax.Precision.HIGHEST,
    )
    y = y + bias[None, :, None, None]
    mean = jnp.mean(y, axis=(2, 3), keepdims=True)
    var = jnp.mean((y - mean) ** 2, axis=(2, 3), keepdims=True)
    y = (y - mean) / jnp.sqrt(var + eps)
    return jnp.maximum(y, 0.0)


if __name__ == "__main__":
    # Small shapes consistent with the module (kernel=3, stride=1, padding=1,
    # InstanceNorm2d(affine=False), ReLU).
    N, Cin, Cout, H, W = 2, 4, 8, 16, 16

    key = jax.random.PRNGKey(0)
    kx, kw, kb = jax.random.split(key, 3)
    x = jax.random.normal(kx, (N, Cin, H, W), jnp.float32)
    weight = jax.random.normal(kw, (Cout, Cin, 3, 3), jnp.float32) * 0.1
    bias = jax.random.normal(kb, (Cout,), jnp.float32) * 0.1

    out = jax.block_until_ready(cbr_forward(x, weight, bias))
    ref = jax.block_until_ready(cbr_reference(x, weight, bias))

    assert out.shape == (N, Cout, H, W), out.shape
    assert jnp.allclose(out, ref, atol=2e-2, rtol=2e-2), (
        float(jnp.max(jnp.abs(out - ref)))
    )
    print("KERNEL_OK")
</pallas_src>

<mosaic_0001>
module attributes {stable_mosaic.version = 11 : i64} {
  func.func @cbr_kernel(%arg0: i32, %arg1: i32, %arg2: i32, %arg3: memref<1x1x8x326xf32, #tpu.memory_space<vmem>>, %arg4: memref<8x72xf32, #tpu.memory_space<vmem>>, %arg5: memref<1x288xf32, #tpu.memory_space<vmem>>, %arg6: memref<1x8x288xf32, #tpu.memory_space<vmem>>, %arg7: memref<8x1xf32, #tpu.memory_space<vmem>>, %arg8: memref<8x1xf32, #tpu.memory_space<vmem>>) attributes {dimension_semantics = [#tpu.dimension_semantics<parallel>, #tpu.dimension_semantics<arbitrary>, #tpu.dimension_semantics<arbitrary>], iteration_bounds = array<i64: 2, 2, 1>, scalar_prefetch = 0 : i64, scratch_operands = 2 : i64, tpu.core_type = #tpu.core_type<tc>, window_params = [{transform_indices = @transform_0, window_bounds = array<i64: 1, 1, 8, 326>}, {pipeline_mode = #tpu.pipeline_mode<synchronous>, transform_indices = @transform_1, window_bounds = array<i64: 8, 72>}, {pipeline_mode = #tpu.pipeline_mode<synchronous>, transform_indices = @transform_2, window_bounds = array<i64: 1, 288>}, {transform_indices = @transform_3, window_bounds = array<i64: 1, 8, 288>}]} {
    %c0_i32 = arith.constant 0 : i32
    %0 = arith.cmpi eq, %arg1, %c0_i32 : i32
    %c0_i32_0 = arith.constant 0 : i32
    %1 = arith.cmpi eq, %arg2, %c0_i32_0 : i32
    %2 = arith.andi %0, %1 : i1
    %3 = arith.extui %2 : i1 to i32
    %c0_i32_1 = arith.constant 0 : i32
    %4 = arith.cmpi ne, %3, %c0_i32_1 : i32
    scf.if %4 {
      %cst_34 = arith.constant 0.000000e+00 : f32
      %32 = vector.broadcast %cst_34 : f32 to vector<8x1xf32>
      %c0_35 = arith.constant 0 : index
      %c0_36 = arith.constant 0 : index
      %33 = vector.load %arg7[%c0_35, %c0_36] : memref<8x1xf32, #tpu.memory_space<vmem>>, vector<8x1xf32>
      tpu.vector_store %arg7[%c0_35, %c0_36], %32 {strides = array<i32>} : memref<8x1xf32, #tpu.memory_space<vmem>>, vector<8x1xf32>,
      %cst_37 = arith.constant 0.000000e+00 : f32
      %34 = vector.broadcast %cst_37 : f32 to vector<8x1xf32>
      %c0_38 = arith.constant 0 : index
      %c0_39 = arith.constant 0 : index
      %35 = vector.load %arg8[%c0_38, %c0_39] : memref<8x1xf32, #tpu.memory_space<vmem>>, vector<8x1xf32>
      tpu.vector_store %arg8[%c0_38, %c0_39], %34 {strides = array<i32>} : memref<8x1xf32, #tpu.memory_space<vmem>>, vector<8x1xf32>,
    } else {
    }
    %c0 = arith.constant 0 : index
    %c0_2 = arith.constant 0 : index
    %c0_3 = arith.constant 0 : index
    %c0_4 = arith.constant 0 : index
    %5 = vector.load %arg3[%c0, %c0_2, %c0_3, %c0_4] : memref<1x1x8x326xf32, #tpu.memory_space<vmem>>, vector<1x1x8x288xf32>
    %6 = vector.shape_cast %5 : vector<1x1x8x288xf32> to vector<8x288xf32>
    %c0_5 = arith.constant 0 : index
    %c0_6 = arith.constant 0 : index
    %c0_7 = arith.constant 0 : index
    %c1 = arith.constant 1 : index
    %7 = vector.load %arg3[%c0_5, %c0_6, %c0_7, %c1] : memref<1x1x8x326xf32, #tpu.memory_space<vmem>>, vector<1x1x8x288xf32>
    %8 = vector.shape_cast %7 : vector<1x1x8x288xf32> to vector<8x288xf32>
    %c0_8 = arith.constant 0 : index
    %c0_9 = arith.constant 0 : index
    %c0_10 = arith.constant 0 : index
    %c2 = arith.constant 2 : index
    %9 = vector.load %arg3[%c0_8, %c0_9, %c0_10, %c2] : memref<1x1x8x326xf32, #tpu.memory_space<vmem>>, vector<1x1x8x288xf32>
    %10 = vector.shape_cast %9 : vector<1x1x8x288xf32> to vector<8x288xf32>
    %c0_11 = arith.constant 0 : index
    %c0_12 = arith.constant 0 : index
    %c0_13 = arith.constant 0 : index
    %c18 = arith.constant 18 : index
    %11 = vector.load %arg3[%c0_11, %c0_12, %c0_13, %c18] : memref<1x1x8x326xf32, #tpu.memory_space<vmem>>, vector<1x1x8x288xf32>
    %12 = vector.shape_cast %11 : vector<1x1x8x288xf32> to vector<8x288xf32>
    %c0_14 = arith.constant 0 : index
    %c0_15 = arith.constant 0 : index
    %c0_16 = arith.constant 0 : index
    %c19 = arith.constant 19 : index
    %13 = vector.load %arg3[%c0_14, %c0_15, %c0_16, %c19] : memref<1x1x8x326xf32, #tpu.memory_space<vmem>>, vector<1x1x8x288xf32>
    %14 = vector.shape_cast %13 : vector<1x1x8x288xf32> to vector<8x288xf32>
    %c0_17 = arith.constant 0 : index
    %c0_18 = arith.constant 0 : index
    %c0_19 = arith.constant 0 : index
    %c20 = arith.constant 20 : index
    %15 = vector.load %arg3[%c0_17, %c0_18, %c0_19, %c20] : memref<1x1x8x326xf32, #tpu.memory_space<vmem>>, vector<1x1x8x288xf32>
    %16 = vector.shape_cast %15 : vector<1x1x8x288xf32> to vector<8x288xf32>
    %c0_20 = arith.constant 0 : index
    %c0_21 = arith.constant 0 : index
    %c0_22 = arith.constant 0 : index
    %c36 = arith.constant 36 : index
    %17 = vector.load %arg3[%c0_20, %c0_21, %c0_22, %c36] : memref<1x1x8x326xf32, #tpu.memory_space<vmem>>, vector<1x1x8x288xf32>
    %18 = vector.shape_cast %17 : vector<1x1x8x288xf32> to vector<8x288xf32>
    %c0_23 = arith.constant 0 : index
    %c0_24 = arith.constant 0 : index
    %c0_25 = arith.constant 0 : index
    %c37 = arith.constant 37 : index
    %19 = vector.load %arg3[%c0_23, %c0_24, %c0_25, %c37] : memref<1x1x8x326xf32, #tpu.memory_space<vmem>>, vector<1x1x8x288xf32>
    %20 = vector.shape_cast %19 : vector<1x1x8x288xf32> to vector<8x288xf32>
    %c0_26 = arith.constant 0 : index
    %c0_27 = arith.constant 0 : index
    %c0_28 = arith.constant 0 : index
    %c38 = arith.constant 38 : index
    %21 = vector.load %arg3[%c0_26, %c0_27, %c0_28, %c38] : memref<1x1x8x326xf32, #tpu.memory_space<vmem>>, vector<1x1x8x288xf32>
    %22 = vector.shape_cast %21 : vector<1x1x8x288xf32> to vector<8x288xf32>
    %23 = tpu.concatenate %6, %8, %10, %12, %14, %16, %18, %20, %22 in 0 : vector<8x288xf32>, vector<8x288xf32>, vector<8x288xf32>, vector<8x288xf32>, vector<8x288xf32>, vector<8x288xf32>, vector<8x288xf32>, vector<8x288xf32>, vector<8x288xf32> -> vector<72x288xf32>
    %c0_29 = arith.constant 0 : index
    %c0_30 = arith.constant 0 : index
    %24 = vector.load %arg4[%c0_29, %c0_30] : memref<8x72xf32, #tpu.memory_space<vmem>>, vector<8x72xf32>
    %cst = arith.constant dense<0.000000e+00> : vector<8x288xf32>
    %25 = tpu.matmul %24, %23, %cst {dimension_numbers = #tpu.dot_dimension_numbers<[1], [0], [0], [1], [0, 0, 1, 1], [], []>} : vector<8x72xf32>, vector<72x288xf32>, vector<8x288xf32> -> vector<8x288xf32>
    %c0_i32_31 = arith.constant 0 : i32
    %26 = arith.cmpi eq, %arg1, %c0_i32_31 : i32
    %27 = arith.extui %26 : i1 to i32
    %c0_i32_32 = arith.constant 0 : i32
    %28 = arith.cmpi ne, %27, %c0_i32_32 : i32
    scf.if %28 {
      %c0_34 = arith.constant 0 : index
      %c0_35 = arith.constant 0 : index
      %32 = vector.load %arg5[%c0_34, %c0_35] : memref<1x288xf32, #tpu.memory_space<vmem>>, vector<1x288xf32>
      %33 = vector.broadcast %32 : vector<1x288xf32> to vector<8x288xf32>
      %34 = arith.mulf %25, %33 : vector<8x288xf32>
      %c0_36 = arith.constant 0 : index
      %c0_37 = arith.constant 0 : index
      %35 = vector.load %arg7[%c0_36, %c0_37] : memref<8x1xf32, #tpu.memory_space<vmem>>, vector<8x1xf32>
      %cst_38 = arith.constant dense<0.000000e+00> : vector<8xf32>
      %36 = vector.multi_reduction <add>, %34, %cst_38 [1] : vector<8x288xf32> to vector<8xf32>
      %37 = vector.shape_cast %36 : vector<8xf32> to vector<8x1xf32>
      %38 = arith.addf %35, %37 : vector<8x1xf32>
      %c0_39 = arith.constant 0 : index
      %c0_40 = arith.constant 0 : index
      %39 = vector.load %arg7[%c0_39, %c0_40] : memref<8x1xf32, #tpu.memory_space<vmem>>, vector<8x1xf32>
      tpu.vector_store %arg7[%c0_39, %c0_40], %38 {strides = array<i32>} : memref<8x1xf32, #tpu.memory_space<vmem>>, vector<8x1xf32>,
      %c0_41 = arith.constant 0 : index
      %c0_42 = arith.constant 0 : index
      %40 = vector.load %arg8[%c0_41, %c0_42] : memref<8x1xf32, #tpu.memory_space<vmem>>, vector<8x1xf32>
      %41 = arith.mulf %34, %25 : vector<8x288xf32>
      %cst_43 = arith.constant dense<0.000000e+00> : vector<8xf32>
      %42 = vector.multi_reduction <add>, %41, %cst_43 [1] : vector<8x288xf32> to vector<8xf32>
      %43 = vector.shape_cast %42 : vector<8xf32> to vector<8x1xf32>
      %44 = arith.addf %40, %43 : vector<8x1xf32>
      %c0_44 = arith.constant 0 : index
      %c0_45 = arith.constant 0 : index
      %45 = vector.load %arg8[%c0_44, %c0_45] : memref<8x1xf32, #tpu.memory_space<vmem>>, vector<8x1xf32>
      tpu.vector_store %arg8[%c0_44, %c0_45], %44 {strides = array<i32>} : memref<8x1xf32, #tpu.memory_space<vmem>>, vector<8x1xf32>,
    } else {
    }
    %c1_i32 = arith.constant 1 : i32
    %29 = arith.cmpi eq, %arg1, %c1_i32 : i32
    %30 = arith.extui %29 : i1 to i32
    %c0_i32_33 = arith.constant 0 : i32
    %31 = arith.cmpi ne, %30, %c0_i32_33 : i32
    scf.if %31 {
      %c0_34 = arith.constant 0 : index
      %c0_35 = arith.constant 0 : index
      %32 = vector.load %arg7[%c0_34, %c0_35] : memref<8x1xf32, #tpu.memory_space<vmem>>, vector<8x1xf32>
      %cst_36 = arith.constant 3.906250e-03 : f32
      %33 = vector.broadcast %cst_36 : f32 to vector<8x1xf32>
      %34 = arith.mulf %32, %33 : vector<8x1xf32>
      %c0_37 = arith.constant 0 : index
      %c0_38 = arith.constant 0 : index
      %35 = vector.load %arg8[%c0_37, %c0_38] : memref<8x1xf32, #tpu.memory_space<vmem>>, vector<8x1xf32>
      %cst_39 = arith.constant 3.906250e-03 : f32
      %36 = vector.broadcast %cst_39 : f32 to vector<8x1xf32>
      %37 = arith.mulf %35, %36 : vector<8x1xf32>
      %38 = arith.mulf %34, %34 : vector<8x1xf32>
      %39 = arith.subf %37, %38 : vector<8x1xf32>
      %cst_40 = arith.constant 0.000000e+00 : f32
      %40 = vector.broadcast %cst_40 : f32 to vector<8x1xf32>
      %41 = arith.maximumf %39, %40 : vector<8x1xf32>
      %cst_41 = arith.constant 9.99999974E-6 : f32
      %42 = vector.broadcast %cst_41 : f32 to vector<8x1xf32>
      %43 = arith.addf %41, %42 : vector<8x1xf32>
      %44 = math.rsqrt %43 : vector<8x1xf32>
      %45 = vector.broadcast %34 : vector<8x1xf32> to vector<8x288xf32>
      %46 = arith.subf %25, %45 : vector<8x288xf32>
      %47 = vector.broadcast %44 : vector<8x1xf32> to vector<8x288xf32>
      %48 = arith.mulf %46, %47 : vector<8x288xf32>
      %cst_42 = arith.constant 0.000000e+00 : f32
      %49 = vector.broadcast %cst_42 : f32 to vector<8x288xf32>
      %50 = arith.maximumf %48, %49 : vector<8x288xf32>
      %c0_43 = arith.constant 0 : index
      %c0_44 = arith.constant 0 : index
      %c0_45 = arith.constant 0 : index
      %51 = vector.load %arg6[%c0_43, %c0_44, %c0_45] : memref<1x8x288xf32, #tpu.memory_space<vmem>>, vector<1x8x288xf32>
      %52 = vector.shape_cast %51 : vector<1x8x288xf32> to vector<8x288xf32>
      %53 = vector.shape_cast %50 : vector<8x288xf32> to vector<1x8x288xf32>
      tpu.vector_store %arg6[%c0_43, %c0_44, %c0_45], %53 {strides = array<i32>} : memref<1x8x288xf32, #tpu.memory_space<vmem>>, vector<1x8x288xf32>,
    } else {
    }
    return
  }
  func.func @transform_0(%arg0: i32, %arg1: i32, %arg2: i32) -> (i32, i32, i32, i32) {
    %c0_i32 = arith.constant 0 : i32
    %c0_i32_0 = arith.constant 0 : i32
    %c0_i32_1 = arith.constant 0 : i32
    return %arg0, %arg2, %c0_i32, %c0_i32_0 : i32, i32, i32, i32
  }
  func.func @transform_1(%arg0: i32, %arg1: i32, %arg2: i32) -> (i32, i32) {
    %c0_i32 = arith.constant 0 : i32
    %c0_i32_0 = arith.constant 0 : i32
    %c0_i32_1 = arith.constant 0 : i32
    return %c0_i32, %c0_i32_0 : i32, i32
  }
  func.func @transform_2(%arg0: i32, %arg1: i32, %arg2: i32) -> (i32, i32) {
    %c0_i32 = arith.constant 0 : i32
    %c0_i32_0 = arith.constant 0 : i32
    %c0_i32_1 = arith.constant 0 : i32
    return %c0_i32, %c0_i32_0 : i32, i32
  }
  func.func @transform_3(%arg0: i32, %arg1: i32, %arg2: i32) -> (i32, i32, i32) {
    %0 = arith.muli %arg2, %arg1 : i32
    %c0_i32 = arith.constant 0 : i32
    %c0_i32_0 = arith.constant 0 : i32
    return %arg0, %c0_i32, %0 : i32, i32, i32
  }
}

</mosaic_0001>

<llo_original>
// kernel: tpu_custom_call.1
$region0: #{tpu_custom_call.1}
  #allocation0 [shape = 'u32[]', space=smem, size = 0x4, offset = 0x4, fixed_abs, tag = 'smem constant byte address 0x4 - core index']
  #allocation1 [shape = 'u32[144,128]{1,0:T(1,128)}', space=vmem, size = 0x12000, scoped, tag = 'internal scratch']
  #allocation2 [shape = 'f32[8,1]{1,0:T(8,128)}', space=vmem, size = 0x1000, scoped, tag = 'scratch operand']
  #allocation3 [shape = 'f32[8,1]{1,0:T(8,128)}', space=vmem, size = 0x1000, scoped, tag = 'scratch operand']
  %s0 = inlined_call_operand.hbm [shape: f32[2,1,8,326], index: 0, kind: input, shape index: {}]
  %s1 = inlined_call_operand.hbm [shape: f32[8,72], index: 1, kind: input, shape index: {}]
  %s2 = inlined_call_operand.vmem [shape: f32[1,288], index: 2, kind: input, shape index: {}]
  %s3 = inlined_call_operand.hbm [shape: f32[2,8,288], index: 3, kind: output, shape index: {}]
  %s4 = sld [smem:[#allocation0]]
  $region65: #{tpu_custom_call.1} parent=0
    _
  %s6 = ssub.s32 1, %s4
  %s7 = scalar_select 0, %s6, %s4
  $region1: #{tpu_custom_call.1} parent=0
    #allocation4 [shape = 'u8[24576]{0}', space=vmem, size = 0x6000, scoped, tag = 'input window, operand 0']
    #allocation5 [shape = 's32[2]{0}', space=sflag, size = 0x8, scoped, tag = 'scoped memory for tpu_custom_call.1']
    #allocation6 [shape = 's32[2]{0}', space=sflag, size = 0x8, scoped, tag = 'scoped memory for tpu_custom_call.1']
    #allocation7 [shape = 'u8[4096]{0}', space=vmem, size = 0x1000, scoped, tag = 'input window, operand 1, single buffered']
    #allocation8 [shape = 's32[1]{0}', space=sflag, size = 0x4, scoped, tag = 'scoped memory for tpu_custom_call.1']
    #allocation9 [shape = 'u8[24576]{0}', space=vmem, size = 0x6000, scoped, tag = 'output window, operand 0']
    %8 = vsyncpa [#allocation5], 0
    %s9 = scalar_lea.sflag [#allocation5], 1
    %10 = vsyncpa %s9, 0
    %11 = vsyncpa [#allocation8], 0
    %12 = vsyncpa [#allocation6], 0
    %s13 = scalar_lea.sflag [#allocation6], 1
    %14 = vsyncpa %s13, 0
    loop: start=0, step=1, limit=6
    $region2: #{tpu_custom_call.1} parent=1 // loop_pre_header
      _
    $region3: #{tpu_custom_call.1} parent=1 // loop_header
      %s16 = sphi 0, %s20
      %p17 = scmp.ge.s32.totalorder %s16, 6
      %s23 = sphi 0, %s42
      %s24 = sphi 0, %s38
      %s25 = sphi 0, %s34
      %s26 = sphi 0, %s23
      %s27 = sphi 0, %s24
      %s28 = sphi 0, %s25
      %s29 = sphi 0, %s26
      %s30 = sphi 0, %s27
      %s31 = sphi 0, %s28
      %s47 = sphi 0, %s49
      %s50 = sphi 0, %s47
      %s51 = sphi 0, %s50
      %s67 = sphi 0, %s51
      %s71 = sphi 0, %s71
      %s73 = sphi 0, %s71
      %s74 = sphi 0, %s73
      %s88 = sphi 0, %s74
      %s92 = sphi 0, %s92
      %s94 = sphi 0, %s92
      %s95 = sphi 0, %s94
      %s109 = sphi 0, %s95
      %s119 = sphi 0, %s121
      %s122 = sphi 0, %s119
      %s123 = sphi 0, %s122
      %s139 = sphi 0, %s123
    $region4: #{tpu_custom_call.1} parent=1 // loop_header_branch
      %19 = sbr.rel (%p17) target = $region8
    $region5: #{tpu_custom_call.1} parent=1 // loop_body
      %s21 = ssub.s32 %s16, 1
      %s22 = ssub.s32 %s16, 2
      %s32 = sadd.s32 1, %s25
      %p33 = scmp.ge.s32.totalorder %s32, 1
      %s34 = scalar_select %p33, 0, %s32
      %s35 = sadd.s32 1, %s24
      %s36 = scalar_select %p33, %s35, %s24
      %p37 = scmp.ge.s32.totalorder %s36, 2
      %s38 = scalar_select %p37, 0, %s36
      %s39 = sadd.s32 1, %s23
      %s40 = scalar_select %p37, %s39, %s23
      %p41 = scmp.ge.s32.totalorder %s40, 2
      %s42 = scalar_select %p41, 0, %s40
      %s43 = ssub.s32 %s23, %s42
      %s44 = ssub.s32 %s25, %s34
      %s45 = sor.u32 %s43, %s44
      %p46 = scmp.eq.s32.totalorder %s45, 0
      %s48 = sadd.s32 %s47, 1
      %s49 = scalar_select %p46, %s47, %s48
      %p52 = pneg %p46
      %p53 = scmp.eq.s32.totalorder %s16, 3
      %p54 = por %p52, %p53
      %p55 = scmp.ne.s32.totalorder %s47, %s50
      %p56 = scmp.eq.s32.totalorder %s16, 0
      %p57 = por %p55, %p56
      %p58 = scmp.ne.s32.totalorder %s47, %s50
      %p59 = scmp.eq.s32.totalorder %s21, 3
      %p60 = por %p58, %p59
      %p61 = scmp.ne.s32.totalorder %s50, %s51
      %p62 = scmp.eq.s32.totalorder %s21, 0
      %p63 = por %p61, %p62
      %p64 = scmp.ne.s32.totalorder %s50, %s51
      %p65 = scmp.eq.s32.totalorder %s22, 3
      %p66 = por %p64, %p65
      %p68 = scmp.ne.s32.totalorder %s51, %s67
      %p69 = scmp.eq.s32.totalorder %s22, 0
      %p70 = por %p68, %p69
      %s72 = sadd.s32 %s71, 1
      %p75 = scmp.eq.s32.totalorder %s16, 3
      %p76 = scmp.ne.s32.totalorder %s71, %s73
      %p77 = scmp.eq.s32.totalorder %s16, 0
      %p78 = por %p76, %p77
      %p79 = scmp.ne.s32.totalorder %s71, %s73
      %p80 = scmp.eq.s32.totalorder %s21, 3
      %p81 = por %p79, %p80
      %p82 = scmp.ne.s32.totalorder %s73, %s74
      %p83 = scmp.eq.s32.totalorder %s21, 0
      %p84 = por %p82, %p83
      %p85 = scmp.ne.s32.totalorder %s73, %s74
      %p86 = scmp.eq.s32.totalorder %s22, 3
      %p87 = por %p85, %p86
      %p89 = scmp.ne.s32.totalorder %s74, %s88
      %p90 = scmp.eq.s32.totalorder %s22, 0
      %p91 = por %p89, %p90
      %s93 = sadd.s32 %s92, 1
      %p96 = scmp.eq.s32.totalorder %s16, 3
      %p97 = scmp.ne.s32.totalorder %s92, %s94
      %p98 = scmp.eq.s32.totalorder %s16, 0
      %p99 = por %p97, %p98
      %p100 = scmp.ne.s32.totalorder %s92, %s94
      %p101 = scmp.eq.s32.totalorder %s21, 3
      %p102 = por %p100, %p101
      %p103 = scmp.ne.s32.totalorder %s94, %s95
      %p104 = scmp.eq.s32.totalorder %s21, 0
      %p105 = por %p103, %p104
      %p106 = scmp.ne.s32.totalorder %s94, %s95
      %p107 = scmp.eq.s32.totalorder %s22, 3
      %p108 = por %p106, %p107
      %p110 = scmp.ne.s32.totalorder %s95, %s109
      %p111 = scmp.eq.s32.totalorder %s22, 0
      %p112 = por %p110, %p111
      %s113 = smul.u32 %s25, %s24
      %s114 = smul.u32 %s34, %s38
      %s115 = ssub.s32 %s23, %s42
      %s116 = ssub.s32 %s113, %s114
      %s117 = sor.u32 %s115, %s116
      %p118 = scmp.eq.s32.totalorder %s117, 0
      %s120 = sadd.s32 %s119, 1
      %s121 = scalar_select %p118, %s119, %s120
      %p124 = pneg %p118
      %p125 = scmp.eq.s32.totalorder %s16, 3
      %p126 = por %p124, %p125
      %p127 = scmp.ne.s32.totalorder %s119, %s122
      %p128 = scmp.eq.s32.totalorder %s16, 0
      %p129 = por %p127, %p128
      %p130 = scmp.ne.s32.totalorder %s119, %s122
      %p131 = scmp.eq.s32.totalorder %s21, 3
      %p132 = por %p130, %p131
      %p133 = scmp.ne.s32.totalorder %s122, %s123
      %p134 = scmp.eq.s32.totalorder %s21, 0
      %p135 = por %p133, %p134
      %p136 = scmp.ne.s32.totalorder %s122, %s123
      %p137 = scmp.eq.s32.totalorder %s22, 3
      %p138 = por %p136, %p137
      %p140 = scmp.ne.s32.totalorder %s123, %s139
      %p141 = scmp.eq.s32.totalorder %s22, 0
      %p142 = por %p140, %p141
      %p143 = scmp.le.s32.totalorder 1, %s16
      %p144 = scmp.lt.s32.totalorder %s16, 5
      %p145 = pnand %p143, %p144
      %p146 = pneg %p145
      // Predicated region
      $region9: #{tpu_custom_call.1} parent=5 // pred_check
        _
      $region10: #{tpu_custom_call.1} parent=5 // pred_check_branch
        %148 = sbr.rel (%p145) target = $region12
      $region11: #{tpu_custom_call.1} parent=5 // pred_region
        %s149 = ssub.s32 %s16, 1
        // Predicated region
        $region13: #{tpu_custom_call.1} parent=11 // pred_check
          %p150 = pneg %p84
        $region14: #{tpu_custom_call.1} parent=11 // pred_check_branch
          %152 = sbr.rel (%p150) target = $region16
        $region15: #{tpu_custom_call.1} parent=11 // pred_region
          %s154 = ssub.s32 128, 128
          %155 = vsyncadd [#allocation8], %s154
          %s157 = sshll.u32 [#allocation7], 4
          %s158 = int_to_ptr.vmem [resolvable:$true] %s157
          %160 = dma.hbm_to_vmem [thread:$0]  %s1, 128, %s158, [#allocation8]
        $region16: #{tpu_custom_call.1} parent=11 // pred_fallthru
          _
        // Predicated region
        $region17: #{tpu_custom_call.1} parent=11 // pred_check
          %p161 = pneg %p105
        $region18: #{tpu_custom_call.1} parent=11 // pred_check_branch
          %163 = sbr.rel (%p161) target = $region20
        $region19: #{tpu_custom_call.1} parent=11 // pred_region
          _
        $region20: #{tpu_custom_call.1} parent=11 // pred_fallthru
          _
      $region12: #{tpu_custom_call.1} parent=5 // pred_fallthru
        _
      %p164 = scmp.lt.s32.totalorder %s16, 4
      // Predicated region
      $region21: #{tpu_custom_call.1} parent=5 // pred_check
        %p165 = pneg %p164
      $region22: #{tpu_custom_call.1} parent=5 // pred_check_branch
        %167 = sbr.rel (%p165) target = $region24
      $region23: #{tpu_custom_call.1} parent=5 // pred_region
        // Predicated region
        $region25: #{tpu_custom_call.1} parent=23 // pred_check
          %p168 = pneg %p57
        $region26: #{tpu_custom_call.1} parent=23 // pred_check_branch
          %170 = sbr.rel (%p168) target = $region28
        $region27: #{tpu_custom_call.1} parent=23 // pred_region
          %s171 = sand.u32 %s47, 1
          %s172 = scalar_lea.sflag [#allocation5], %s171
          %s173 = sand.u32 %s47, 1
          %s174 = smul.addr %s173, 24
          %s175 = scalar_lea.vmem [#allocation4], %s174
          %s177 = ssub.s32 384, 384
          %178 = vsyncadd %s172, %s177
          %s179 = smul.addr %s25, 3
          %s180 = smul.addr %s23, 3
          %s181 = sadd.s32 %s179, %s180
          %s182 = smul.addr %s181, 128
          %s183 = scalar_lea.hbm %s0, %s182
          %s185 = sshll.u32 %s175, 4
          %s186 = int_to_ptr.vmem [resolvable:$true] %s185
          %188 = dma.hbm_to_vmem [thread:$0]  %s183, 384, %s186, %s172
        $region28: #{tpu_custom_call.1} parent=23 // pred_fallthru
          _
      $region24: #{tpu_custom_call.1} parent=5 // pred_fallthru
        _
      %p189 = scmp.le.s32.totalorder 1, %s16
      %p190 = scmp.lt.s32.totalorder %s16, 5
      %p191 = pnand %p189, %p190
      %p192 = pneg %p191
      // Predicated region
      $region29: #{tpu_custom_call.1} parent=5 // pred_check
        _
      $region30: #{tpu_custom_call.1} parent=5 // pred_check_branch
        %194 = sbr.rel (%p191) target = $region32
      $region31: #{tpu_custom_call.1} parent=5 // pred_region
        %s195 = ssub.s32 %s16, 1
        %s196 = sand.u32 %s50, 1
        %s197 = scalar_lea.sflag [#allocation5], %s196
        %s198 = sand.u32 %s50, 1
        %s199 = smul.addr %s198, 24
        %s200 = scalar_lea.vmem [#allocation4], %s199
        // Predicated region
        $region33: #{tpu_custom_call.1} parent=31 // pred_check
          %p201 = pneg %p63
        $region34: #{tpu_custom_call.1} parent=31 // pred_check_branch
          %203 = sbr.rel (%p201) target = $region36
        $region35: #{tpu_custom_call.1} parent=31 // pred_region
          %204 = dma.done %s197, 384
        $region36: #{tpu_custom_call.1} parent=31 // pred_fallthru
          _
        // Predicated region
        $region37: #{tpu_custom_call.1} parent=31 // pred_check
          %p205 = pneg %p84
        $region38: #{tpu_custom_call.1} parent=31 // pred_check_branch
          %207 = sbr.rel (%p205) target = $region40
        $region39: #{tpu_custom_call.1} parent=31 // pred_region
          %208 = dma.done [#allocation8], 128
        $region40: #{tpu_custom_call.1} parent=31 // pred_fallthru
          _
        %s209 = sand.u32 %s50, 1
        %s210 = scalar_lea.sflag [#allocation5], %s209
        %s211 = sand.u32 %s50, 1
        %s212 = smul.addr %s211, 24
        %s213 = scalar_lea.vmem [#allocation4], %s212
        %p214 = pneg %p63
        %p215 = pneg %p60
        %p216 = pneg %p84
        %p217 = pneg %p81
        %p218 = pneg %p105
        %p219 = pneg %p102
        %p220 = pneg %p135
        %p221 = pneg %p132
        %s222 = sand.u32 %s122, 1
        %s223 = scalar_lea.sflag [#allocation6], %s222
        %s224 = sand.u32 %s122, 1
        %s225 = smul.addr %s224, 24
        %s226 = scalar_lea.vmem [#allocation9], %s225
        %s227 = smul.u32 %s28, %s27
        %s228 = smul.u32 3, %s227
        %p229 = scmp.eq.s32.totalorder %s27, 0
        %p230 = scmp.eq.s32.totalorder %s28, 0
        %p231 = pnand %p229, %p230
        %p232 = pneg %p231
        // Predicated region
        $region41: #{tpu_custom_call.1} parent=31 // pred_check
          _
        $region42: #{tpu_custom_call.1} parent=31 // pred_check_branch
          %234 = sbr.rel (%p231) target = $region44
        $region43: #{tpu_custom_call.1} parent=31 // pred_region
          %vm235 = vcmask 7168
          %236 = vst.msk [vmem:[#allocation2] sm:$0xff] %vm235, 0.0
          %237 = vst.msk [vmem:[#allocation3] sm:$0xff] %vm235, 0.0
        $region44: #{tpu_custom_call.1} parent=31 // pred_fallthru
          _
        %v238 = vld [vmem:[%s200] sm:$0xff]
        %v239 = vld [vmem:[%s200 + $0x8] sm:$0xff]
        %v240 = vld [vmem:[%s200 + $0x10] sm:$0xff]
        %244 = vrot.lane.b32.xlu0 %v238, 127
        %v245 = vpop.permute.xlu0 %244
        %246 = vrot.lane.b32.xlu0 %v239, 127
        %v247 = vpop.permute.xlu0 %246
        %248 = vrot.lane.b32.xlu0 %v240, 127
        %v249 = vpop.permute.xlu0 %248
        %vm250 = vcmask 1039360
        %v251 = vsel %vm250, %v245, %v247
        %v252 = vsel %vm250, %v247, %v249
        %256 = vrot.lane.b32.xlu0 %v238, 126
        %v257 = vpop.permute.xlu0 %256
        %258 = vrot.lane.b32.xlu0 %v239, 126
        %v259 = vpop.permute.xlu0 %258
        %260 = vrot.lane.b32.xlu0 %v240, 126
        %v261 = vpop.permute.xlu0 %260
        %vm262 = vcmask 1031168
        %v263 = vsel %vm262, %v257, %v259
        %v264 = vsel %vm262, %v259, %v261
        %268 = vrot.lane.b32.xlu0 %v238, 110
        %v269 = vpop.permute.xlu0 %268
        %270 = vrot.lane.b32.xlu0 %v239, 110
        %v271 = vpop.permute.xlu0 %270
        %272 = vrot.lane.b32.xlu0 %v240, 110
        %v273 = vpop.permute.xlu0 %272
        %vm274 = vcmask 900096
        %v275 = vsel %vm274, %v269, %v271
        %v276 = vsel %vm274, %v271, %v273
        %280 = vrot.lane.b32.xlu0 %v238, 109
        %v281 = vpop.permute.xlu0 %280
        %282 = vrot.lane.b32.xlu0 %v239, 109
        %v283 = vpop.permute.xlu0 %282
        %284 = vrot.lane.b32.xlu0 %v240, 109
        %v285 = vpop.permute.xlu0 %284
        %vm286 = vcmask 891904
        %v287 = vsel %vm286, %v281, %v283
        %v288 = vsel %vm286, %v283, %v285
        %292 = vrot.lane.b32.xlu0 %v238, 108
        %v293 = vpop.permute.xlu0 %292
        %294 = vrot.lane.b32.xlu0 %v239, 108
        %v295 = vpop.permute.xlu0 %294
        %296 = vrot.lane.b32.xlu0 %v240, 108
        %v297 = vpop.permute.xlu0 %296
        %vm298 = vcmask 883712
        %v299 = vsel %vm298, %v293, %v295
        %v300 = vsel %vm298, %v295, %v297
        %304 = vrot.lane.b32.xlu0 %v238, 92
        %v305 = vpop.permute.xlu0 %304
        %306 = vrot.lane.b32.xlu0 %v239, 92
        %v307 = vpop.permute.xlu0 %306
        %308 = vrot.lane.b32.xlu0 %v240, 92
        %v309 = vpop.permute.xlu0 %308
        %vm310 = vcmask 752640
        %v311 = vsel %vm310, %v305, %v307
        %v312 = vsel %vm310, %v307, %v309
        %316 = vrot.lane.b32.xlu0 %v238, 91
        %v317 = vpop.permute.xlu0 %316
        %318 = vrot.lane.b32.xlu0 %v239, 91
        %v319 = vpop.permute.xlu0 %318
        %320 = vrot.lane.b32.xlu0 %v240, 91
        %v321 = vpop.permute.xlu0 %320
        %vm322 = vcmask 744448
        %v323 = vsel %vm322, %v317, %v319
        %v324 = vsel %vm322, %v319, %v321
        %328 = vrot.lane.b32.xlu0 %v238, 90
        %v329 = vpop.permute.xlu0 %328
        %330 = vrot.lane.b32.xlu0 %v239, 90
        %v331 = vpop.permute.xlu0 %330
        %332 = vrot.lane.b32.xlu0 %v240, 90
        %v333 = vpop.permute.xlu0 %332
        %vm334 = vcmask 736256
        %v335 = vsel %vm334, %v329, %v331
        %v336 = vsel %vm334, %v331, %v333
        %v340 = vld [vmem:[#allocation7] sm:$0xff]
        %vm341 = vcmask 588800
        %v343 = vsel %vm341, %v340, 0
        %345 = vmatprep.subr.mxu0 0.0
        %346 = vmatpush1.msra.mxu0 0.0
        %347 = vmatprep.subr.mxu0 0.0
        %348 = vmatpush1.msra.mxu0 0.0
        %349 = vmatprep.subr.mxu0 0.0
        %350 = vmatpush1.msra.mxu0 0.0
        %351 = vmatprep.subr.mxu0 0.0
        %352 = vmatpush1.msra.mxu0 0.0
        %353 = vmatprep.subr.mxu0 0.0
        %354 = vmatpush1.msra.mxu0 0.0
        %355 = vmatprep.subr.mxu0 0.0
        %356 = vmatpush1.msra.mxu0 0.0
        %357 = vmatprep.subr.mxu0 0.0
        %358 = vmatpush1.msra.mxu0 0.0
        %359 = vmatprep.subr.mxu0 %v336
        %360 = vmatpush1.msra.mxu0 %v335
        %361 = vmatprep.subr.mxu0 %v324
        %362 = vmatpush1.msra.mxu0 %v323
        %363 = vmatprep.subr.mxu0 %v312
        %364 = vmatpush1.msra.mxu0 %v311
        %365 = vmatprep.subr.mxu0 %v300
        %366 = vmatpush1.msra.mxu0 %v299
        %367 = vmatprep.subr.mxu0 %v288
        %368 = vmatpush1.msra.mxu0 %v287
        %369 = vmatprep.subr.mxu0 %v276
        %370 = vmatpush1.msra.mxu0 %v275
        %371 = vmatprep.subr.mxu0 %v264
        %372 = vmatpush1.msra.mxu0 %v263
        %373 = vmatprep.subr.mxu0 %v252
        %374 = vmatpush1.msra.mxu0 %v251
        %375 = vmatprep.subr.mxu0 %v239
        %376 = vmatpush1.msra.mxu0 %v238
        %377 = vmatprep.subr.mxu0 0.0
        %378 = vmatpush2.msra.mxu0 0.0
        %379 = vmatprep.subr.mxu0 0.0
        %380 = vmatpush2.msra.mxu0 0.0
        %381 = vmatprep.subr.mxu0 0.0
        %382 = vmatpush2.msra.mxu0 0.0
        %383 = vmatprep.subr.mxu0 0.0
        %384 = vmatpush2.msra.mxu0 0.0
        %385 = vmatprep.subr.mxu0 0.0
        %386 = vmatpush2.msra.mxu0 0.0
        %387 = vmatprep.subr.mxu0 0.0
        %388 = vmatpush2.msra.mxu0 0.0
        %389 = vmatprep.subr.mxu0 0.0
        %390 = vmatpush2.msra.mxu0 0.0
        %391 = vmatprep.subr.mxu0 0.0
        %392 = vmatpush2.msra.mxu0 0.0
        %393 = vmatprep.subr.mxu0 0.0
        %394 = vmatpush2.msra.mxu0 0.0
        %395 = vmatprep.subr.mxu0 0.0
        %396 = vmatpush2.msra.mxu0 0.0
        %397 = vmatprep.subr.mxu0 0.0
        %398 = vmatpush2.msra.mxu0 0.0
        %399 = vmatprep.subr.mxu0 0.0
        %400 = vmatpush2.msra.mxu0 0.0
        %401 = vmatprep.subr.mxu0 0.0
        %402 = vmatpush2.msra.mxu0 0.0
        %403 = vmatprep.subr.mxu0 0.0
        %404 = vmatpush2.msra.mxu0 0.0
        %405 = vmatprep.subr.mxu0 0.0
        %406 = vmatpush2.msra.mxu0 0.0
        %407 = vmatprep.subr.mxu0 0.0
        %408 = vmatpush2.msra.mxu0 0.0
        %409 = vmatprep.mubr.f32.mxu0 0.0
        %410 = vmatmul.mubr.f32.gmra.mxu0 %v343
        %v411 = vpop.f32.mrf.mxu0
        %v412 = vadd.f32 0.0, %v411
        %v413 = vpop.f32.mrf.mxu0
        %v414 = vadd.f32 0.0, %v413
        %415 = vdwg.mxu0
        %416 = vmatprep.subr.mxu0 0.0
        %417 = vmatpush1.msra.mxu0 0.0
        %418 = vmatprep.subr.mxu0 0.0
        %419 = vmatpush1.msra.mxu0 0.0
        %420 = vmatprep.subr.mxu0 0.0
        %421 = vmatpush1.msra.mxu0 0.0
        %422 = vmatprep.subr.mxu0 0.0
        %423 = vmatpush1.msra.mxu0 0.0
        %424 = vmatprep.subr.mxu0 0.0
        %425 = vmatpush1.msra.mxu0 0.0
        %426 = vmatprep.subr.mxu0 0.0
        %427 = vmatpush1.msra.mxu0 0.0
        %428 = vmatprep.subr.mxu0 0.0
        %429 = vmatpush1.msra.mxu0 0.0
        %430 = vmatprep.subr.mxu0 0.0
        %431 = vmatpush1.msra.mxu0 %v333
        %432 = vmatprep.subr.mxu0 0.0
        %433 = vmatpush1.msra.mxu0 %v321
        %434 = vmatprep.subr.mxu0 0.0
        %435 = vmatpush1.msra.mxu0 %v309
        %436 = vmatprep.subr.mxu0 0.0
        %437 = vmatpush1.msra.mxu0 %v297
        %438 = vmatprep.subr.mxu0 0.0
        %439 = vmatpush1.msra.mxu0 %v285
        %440 = vmatprep.subr.mxu0 0.0
        %441 = vmatpush1.msra.mxu0 %v273
        %442 = vmatprep.subr.mxu0 0.0
        %443 = vmatpush1.msra.mxu0 %v261
        %444 = vmatprep.subr.mxu0 0.0
        %445 = vmatpush1.msra.mxu0 %v249
        %446 = vmatprep.subr.mxu0 0.0
        %447 = vmatpush1.msra.mxu0 %v240
        %448 = vmatprep.subr.mxu0 0.0
        %449 = vmatpush2.msra.mxu0 0.0
        %450 = vmatprep.subr.mxu0 0.0
        %451 = vmatpush2.msra.mxu0 0.0
        %452 = vmatprep.subr.mxu0 0.0
        %453 = vmatpush2.msra.mxu0 0.0
        %454 = vmatprep.subr.mxu0 0.0
        %455 = vmatpush2.msra.mxu0 0.0
        %456 = vmatprep.subr.mxu0 0.0
        %457 = vmatpush2.msra.mxu0 0.0
        %458 = vmatprep.subr.mxu0 0.0
        %459 = vmatpush2.msra.mxu0 0.0
        %460 = vmatprep.subr.mxu0 0.0
        %461 = vmatpush2.msra.mxu0 0.0
        %462 = vmatprep.subr.mxu0 0.0
        %463 = vmatpush2.msra.mxu0 0.0
        %464 = vmatprep.subr.mxu0 0.0
        %465 = vmatpush2.msra.mxu0 0.0
        %466 = vmatprep.subr.mxu0 0.0
        %467 = vmatpush2.msra.mxu0 0.0
        %468 = vmatprep.subr.mxu0 0.0
        %469 = vmatpush2.msra.mxu0 0.0
        %470 = vmatprep.subr.mxu0 0.0
        %471 = vmatpush2.msra.mxu0 0.0
        %472 = vmatprep.subr.mxu0 0.0
        %473 = vmatpush2.msra.mxu0 0.0
        %474 = vmatprep.subr.mxu0 0.0
        %475 = vmatpush2.msra.mxu0 0.0
        %476 = vmatprep.subr.mxu0 0.0
        %477 = vmatpush2.msra.mxu0 0.0
        %478 = vmatprep.subr.mxu0 0.0
        %479 = vmatpush2.msra.mxu0 0.0
        %480 = vmatprep.mubr.f32.mxu0 0.0
        %481 = vmatmul.mubr.f32.gmra.mxu0 %v343
        %v482 = vpop.f32.mrf.mxu0
        %v483 = vadd.f32 0.0, %v482
        %v484 = vpop.f32.mrf.mxu0
        %485 = vdwg.mxu0
        // Predicated region
        $region45: #{tpu_custom_call.1} parent=31 // pred_check
          %p486 = pneg %p229
        $region46: #{tpu_custom_call.1} parent=31 // pred_check_branch
          %488 = sbr.rel (%p486) target = $region48
        $region47: #{tpu_custom_call.1} parent=31 // pred_region
          %v489 = vld [vmem:[%s2] sm:$0x7]
          %v491 = vlaneseq
          %v492 = vshrl.u32 %v491, 7
          %v493 = vsub.s32 0, %v492
          %v494 = vrot.slane %v489, %v493
          %v495 = vlaneseq
          %v496 = vshrl.u32 %v495, 7
          %v497 = vsub.s32 1, %v496
          %v498 = vrot.slane %v489, %v497
          %v499 = vlaneseq
          %v500 = vshrl.u32 %v499, 7
          %v501 = vsub.s32 2, %v500
          %v502 = vrot.slane %v489, %v501
          %v506 = vmul.f32 %v412, %v494
          %v507 = vmul.f32 %v414, %v498
          %v508 = vmul.f32 %v483, %v502
          %v509 = vld [vmem:[#allocation2] sm:$0xff]
          %v510 = vadd.f32 %v506, %v507
          %vm511 = vcmask 261120
          %v512 = vsel %vm511, %v508, 0.0
          %v513 = vadd.f32 %v510, %v512
          %514 = vadd.xlane.f32.xlu0 %v513
          %v515 = vpop.xlane.xlu0 %514
          %v516 = vadd.f32 %v509, %v515
          %vm517 = vcmask 7168
          %518 = vst.msk [vmem:[#allocation2] sm:$0xff] %vm517, %v516
          %v519 = vld [vmem:[#allocation3] sm:$0xff]
          %v520 = vmul.f32 %v506, %v412
          %v521 = vmul.f32 %v507, %v414
          %v522 = vmul.f32 %v508, %v483
          %v523 = vadd.f32 %v520, %v521
          %v524 = vsel %vm511, %v522, 0.0
          %v525 = vadd.f32 %v523, %v524
          %526 = vadd.xlane.f32.xlu0 %v525
          %v527 = vpop.xlane.xlu0 %526
          %v528 = vadd.f32 %v519, %v527
          %529 = vst.msk [vmem:[#allocation3] sm:$0xff] %vm517, %v528
        $region48: #{tpu_custom_call.1} parent=31 // pred_fallthru
          _
        %p530 = scmp.eq.s32.totalorder %s27, 1
        // Predicated region
        $region49: #{tpu_custom_call.1} parent=31 // pred_check
          %p531 = pneg %p530
        $region50: #{tpu_custom_call.1} parent=31 // pred_check_branch
          %533 = sbr.rel (%p531) target = $region52
        $region51: #{tpu_custom_call.1} parent=31 // pred_region
          %v534 = vld [vmem:[#allocation2] sm:$0xff]
          %v535 = vmul.f32 %v534, 0.00390625
          %v536 = vld [vmem:[#allocation3] sm:$0xff]
          %v537 = vmul.f32 %v536, 0.00390625
          %v538 = vmul.f32 %v535, %v535
          %v539 = vsub.f32 %v537, %v538
          %v540 = vmax.f32 %v539, 0.0
          %v541 = vadd.f32 %v540, 1e-05
          %v542 = vrsqrt.pop %v541
          %544 = vset.pattern.permute.xlu0 0
          %545 = vperm.xlu0 %544, %v535
          %v546 = vpop.permute.xlu0 %545
          %v548 = vsub.f32 %v412, %v546
          %v549 = vsub.f32 %v414, %v546
          %v550 = vsub.f32 %v483, %v546
          %552 = vset.pattern.permute.xlu0 0
          %553 = vperm.xlu0 %552, %v542
          %v554 = vpop.permute.xlu0 %553
          %v556 = vmul.f32 %v548, %v554
          %v557 = vmul.f32 %v549, %v554
          %v558 = vmul.f32 %v550, %v554
          %v559 = vmax.f32 %v556, 0.0
          %v560 = vmax.f32 %v557, 0.0
          %v561 = vmax.f32 %v558, 0.0
          %562 = vst [vmem:[%s226] sm:$0xff] %v559
          %563 = vst [vmem:[%s226 + $0x8] sm:$0xff] %v560
          %vm564 = vcmask 261120
          %565 = vst.msk [vmem:[%s226 + $0x10] sm:$0xff] %vm564, %v561
        $region52: #{tpu_custom_call.1} parent=31 // pred_fallthru
          _
        %s566 = sand.u32 %s122, 1
        %s567 = scalar_lea.sflag [#allocation6], %s566
        %s568 = sand.u32 %s122, 1
        %s569 = smul.addr %s568, 24
        %s570 = scalar_lea.vmem [#allocation9], %s569
        // Predicated region
        $region53: #{tpu_custom_call.1} parent=31 // pred_check
          %p571 = pneg %p132
        $region54: #{tpu_custom_call.1} parent=31 // pred_check_branch
          %573 = sbr.rel (%p571) target = $region56
        $region55: #{tpu_custom_call.1} parent=31 // pred_region
          %s574 = smul.u32 %s28, %s27
          %s575 = smul.u32 3, %s574
          %s577 = ssub.s32 384, 384
          %578 = vsyncadd %s567, %s577
          %s579 = smul.addr %s26, 3
          %s580 = sadd.s32 %s575, %s579
          %s581 = smul.addr %s580, 128
          %s582 = scalar_lea.hbm %s3, %s581
          %s584 = sshll.u32 %s570, 4
          %s585 = int_to_ptr.vmem [resolvable:$true] %s584
          %587 = dma.vmem_to_hbm [thread:$0]  %s585, 384, %s582, %s567
        $region56: #{tpu_custom_call.1} parent=31 // pred_fallthru
          _
      $region32: #{tpu_custom_call.1} parent=5 // pred_fallthru
        _
      %p588 = scmp.le.s32.totalorder 2, %s16
      // Predicated region
      $region57: #{tpu_custom_call.1} parent=5 // pred_check
        %p589 = pneg %p588
      $region58: #{tpu_custom_call.1} parent=5 // pred_check_branch
        %591 = sbr.rel (%p589) target = $region60
      $region59: #{tpu_custom_call.1} parent=5 // pred_region
        %s592 = ssub.s32 %s16, 2
        // Predicated region
        $region61: #{tpu_custom_call.1} parent=59 // pred_check
          %p593 = pneg %p138
        $region62: #{tpu_custom_call.1} parent=59 // pred_check_branch
          %595 = sbr.rel (%p593) target = $region64
        $region63: #{tpu_custom_call.1} parent=59 // pred_region
          %s596 = sand.u32 %s123, 1
          %s597 = scalar_lea.sflag [#allocation6], %s596
          %s598 = sand.u32 %s123, 1
          %s599 = smul.addr %s598, 24
          %s600 = scalar_lea.vmem [#allocation9], %s599
          %601 = dma.done %s597, 384
        $region64: #{tpu_custom_call.1} parent=59 // pred_fallthru
          _
      $region60: #{tpu_custom_call.1} parent=5 // pred_fallthru
        _
    $region6: #{tpu_custom_call.1} parent=1 // loop_footer
      %s20 = sadd.s32 1, %s16
    $region7: #{tpu_custom_call.1} parent=1 // loop_footer_branch
      %15 = sbr.rel target = $region3
    $region8: #{tpu_custom_call.1} parent=1 // loop_exit
      _
    %602 = vsyncpa [#allocation5], 1
    %s603 = scalar_lea.sflag [#allocation5], 1
    %604 = vsyncpa %s603, 1
    %605 = vsyncpa [#allocation8], 1
    %606 = vsyncpa [#allocation6], 1
    %s607 = scalar_lea.sflag [#allocation6], 1
    %608 = vsyncpa %s607, 1

</llo_original>
